<compile_context>
chip_gen: v7x
topology: tpu7x:2x2x1
jax: 0.10.0
libtpu: 0.0.40
codegen_flags: <defaults>
</compile_context>

<pallas_src>
import jax
import jax.numpy as jnp
from jax.experimental import pallas as pl
from jax.experimental.pallas import tpu as pltpu


def _round_up(x, m):
    return (x + m - 1) // m * m


def _cdiv(a, b):
    return -(-a // b)


def _softplus_f32(y):
    # torch.nn.Softplus(beta=1, threshold=20), computed in f32.
    return jnp.where(y > 20.0, y, jnp.log1p(jnp.exp(jnp.minimum(y, 20.0))))


def _layer_dims(hidden_neurons, latent_space):
    """Replicates PredictionHead's layer construction exactly.

    Linear(latent, h[0]) + Softplus,
    then for i in 1..len(h)-2: Linear(h[i], h[i+1]) + Softplus,
    then Linear(h[-1], 1).
    (This wiring requires h[0] == h[1] when len(h) > 1, as in the PyTorch spec.)
    """
    dims = [(latent_space, hidden_neurons[0], True)]
    for i in range(1, len(hidden_neurons) - 1):
        dims.append((hidden_neurons[i], hidden_neurons[i + 1], True))
    dims.append((hidden_neurons[-1], 1, False))
    return dims


def _make_mlp_kernel(num_layers, softplus_flags, tm, compute_dtype):
    """Fused MLP kernel.  refs = (x, w0, b0, ..., w_{L-1}, b_{L-1}, out).

    x   : (tm, K0)   f32   (cast to bf16 in-kernel; K0 = latent, un-padded)
    w_l : (K_l, N_l) bf16  (N_l multiple of 128; *padded K rows are ZERO* --
                            they cancel the softplus(0)=ln2 carried by the
                            padded columns of the previous activation.  This
                            invariant is load-bearing and is maintained by
                            init_params below.)
    b_l : (1, N_l)   f32
    out : (1, tm)    f32   lane-dense row = column 0 of the last GEMM, transposed.
    """

    def kernel(*refs):
        x_ref = refs[0]
        o_ref = refs[-1]
        h = x_ref[...].astype(compute_dtype)              # f32 -> bf16 in-kernel
        y = None
        for li in range(num_layers):
            w_ref = refs[1 + 2 * li]
            b_ref = refs[2 + 2 * li]
            # MXU: bf16 x bf16 -> f32 accumulate.
            y = jnp.dot(h, w_ref[...], preferred_element_type=jnp.float32)
            y = y + b_ref[...]                             # f32 bias add (VPU)
            if softplus_flags[li]:
                y = _softplus_f32(y)                       # f32 EUP/VPU
                h = y.astype(compute_dtype)                # back to bf16 for next GEMM
        # y: (tm, 128) f32 -- only column 0 is the prediction.  Emit it as a
        # lane-dense (1, tm) row: per-(128,128) block transpose (XLU slot),
        # keep row 0, store lane-dense into the output row.
        for j in range(tm // 128):
            blk_t = jnp.transpose(y[j * 128:(j + 1) * 128, :])   # (128, 128) f32
            o_ref[:, j * 128:(j + 1) * 128] = blk_t[0:1, :]

    return kernel


def make_prediction_head(hidden_neurons, latent_space, activation="Softplus",
                         *, tm_max=1024, compute_dtype=jnp.bfloat16):
    # NOTE: `activation` is accepted for interface fidelity but unused -- the
    # reference module instantiates it and never adds it to the Sequential.
    del activation
    assert tm_max % 128 == 0
    dims = _layer_dims(hidden_neurons, latent_space)
    num_layers = len(dims)
    softplus_flags = tuple(sp for _, _, sp in dims)
    # Feature-dim padding: layer-0 K stays at `latent_space` (no x padding ->
    # no doubled input traffic); every layer's N is padded to a multiple of
    # 128 lanes; layer l>0's K equals layer l-1's padded N.
    n_pads = [_round_up(n, 128) for _, n, _ in dims]
    k_pads = [latent_space] + n_pads[:-1]

    def init_params(key):
        """PyTorch nn.Linear default init; returns (padded bf16/f32 params, raw f32)."""
        params, raw = [], []
        for (k, n, _), kp, np_ in zip(dims, k_pads, n_pads):
            key, kw, kb = jax.random.split(key, 3)
            bound = 1.0 / (k ** 0.5)
            w = jax.random.uniform(kw, (k, n), jnp.float32, -bound, bound)
            b = jax.random.uniform(kb, (n,), jnp.float32, -bound, bound)
            # One-time layout prep.  Padded rows/cols are ZERO: the zero K rows
            # of layer l+1 cancel the softplus(0)=ln2 sitting in the padded
            # columns of layer l's activation.  Do NOT change this padding.
            wp = jnp.zeros((kp, np_), compute_dtype).at[:k, :n].set(
                w.astype(compute_dtype))
            bp = jnp.zeros((1, np_), jnp.float32).at[0, :n].set(b)
            params.append((wp, bp))
            raw.append((w, b))
        return params, raw

    @jax.jit
    def forward(x, params):
        b_sz, latent = x.shape
        assert latent == latent_space

        # Tile selection: multiples of 128 (lane-dense (1, tm) output blocks,
        # bf16 16-sublane alignment), capped at tm_max, and >= 2 grid steps as
        # soon as the batch spans more than one 128-row tile so v7x's two
        # TensorCores both get work ("parallel" axis).
        m128 = _round_up(b_sz, 128)
        if m128 <= 128:
            tm = 128
        else:
            tm = min(tm_max, _round_up(_cdiv(m128, 2), 128))
        num_tiles = _cdiv(b_sz, tm)
        mp = num_tiles * tm

        if b_sz < tm:
            # Tiny batches only: pad the short tail so the single block is in
            # bounds.  Large batches pass through untouched; the edge block's
            # out-of-bounds rows are garbage that stays in its own rows
            # (row-wise math only) and is sliced away below.
            x_in = jnp.pad(x, ((0, tm - b_sz), (0, 0)))
        else:
            x_in = x

        kernel = _make_mlp_kernel(num_layers, softplus_flags, tm, compute_dtype)

        in_specs = [pl.BlockSpec((tm, latent_space), lambda i: (i, 0))]
        flat_args = [x_in]
        for (wp, bp), kp, np_ in zip(params, k_pads, n_pads):
            # Constant index maps -> weights/biases fetched once, VMEM-resident.
            in_specs.append(pl.BlockSpec((kp, np_), lambda i: (0, 0)))
            in_specs.append(pl.BlockSpec((1, np_), lambda i: (0, 0)))
            flat_args.extend((wp, bp))

        out = pl.pallas_call(
            kernel,
            out_shape=jax.ShapeDtypeStruct((1, mp), jnp.float32),
            grid=(num_tiles,),
            in_specs=in_specs,
            out_specs=pl.BlockSpec((1, tm), lambda i: (0, i)),
            compiler_params=pltpu.CompilerParams(
                dimension_semantics=("parallel",)),
        )(*flat_args)
        return out[0, :b_sz].reshape(b_sz, 1)

    return init_params, forward


def _reference_forward(x, raw_params):
    """Pure-JAX f32 reference matching the PyTorch module."""
    h = x
    n = len(raw_params)
    for i, (w, b) in enumerate(raw_params):
        h = h @ w + b
        if i + 1 < n:
            h = _softplus_f32(h)
    return h


if __name__ == "__main__":
    latent_space = 64
    hidden_neurons = [32, 32, 32]   # h[0] == h[1] as required by the module's wiring
    batch = 4

    key = jax.random.PRNGKey(0)
    key, kx, kx2, kp = jax.random.split(key, 4)
    x = jax.random.normal(kx, (batch, latent_space), jnp.float32)

    init_params, forward = make_prediction_head(
        hidden_neurons, latent_space, activation="Softplus")
    params, params_f32 = init_params(kp)

    # Small-batch path (single tile, tail-padded).
    out = jax.block_until_ready(forward(x, params))
    assert out.shape == (batch, 1), out.shape
    ref = _reference_forward(x, params_f32)
    err = float(jnp.max(jnp.abs(out - ref)))
    assert err < 5e-2, f"max abs err {err}"

    # Multi-tile path (no pad, 2 grid steps, uneven edge block, tm=256 epilogue).
    batch2 = 300
    x2 = jax.random.normal(kx2, (batch2, latent_space), jnp.float32)
    out2 = jax.block_until_ready(forward(x2, params))
    assert out2.shape == (batch2, 1), out2.shape
    assert bool(jnp.all(jnp.isfinite(out2)))
    ref2 = _reference_forward(x2, params_f32)
    err2 = float(jnp.max(jnp.abs(out2 - ref2)))
    assert err2 < 1.5e-1, f"max abs err (batch={batch2}) {err2}"  # bf16 MXU tolerance

    print("KERNEL_OK")
</pallas_src>

<mosaic_0001>
module attributes {stable_mosaic.version = 11 : i64} {
  func.func @kernel(%arg0: i32, %arg1: memref<128x64xf32, #tpu.memory_space<vmem>>, %arg2: memref<64x128xbf16, #tpu.memory_space<vmem>>, %arg3: memref<1x128xf32, #tpu.memory_space<vmem>>, %arg4: memref<128x128xbf16, #tpu.memory_space<vmem>>, %arg5: memref<1x128xf32, #tpu.memory_space<vmem>>, %arg6: memref<128x128xbf16, #tpu.memory_space<vmem>>, %arg7: memref<1x128xf32, #tpu.memory_space<vmem>>, %arg8: memref<1x128xf32, #tpu.memory_space<vmem>>) attributes {dimension_semantics = [#tpu.dimension_semantics<parallel>], iteration_bounds = array<i64: 1>, scalar_prefetch = 0 : i64, scratch_operands = 0 : i64, tpu.core_type = #tpu.core_type<tc>, window_params = [{transform_indices = @transform_0, window_bounds = array<i64: 128, 64>}, {pipeline_mode = #tpu.pipeline_mode<synchronous>, transform_indices = @transform_1, window_bounds = array<i64: 64, 128>}, {pipeline_mode = #tpu.pipeline_mode<synchronous>, transform_indices = @transform_2, window_bounds = array<i64: 1, 128>}, {pipeline_mode = #tpu.pipeline_mode<synchronous>, transform_indices = @transform_3, window_bounds = array<i64: 128, 128>}, {pipeline_mode = #tpu.pipeline_mode<synchronous>, transform_indices = @transform_4, window_bounds = array<i64: 1, 128>}, {pipeline_mode = #tpu.pipeline_mode<synchronous>, transform_indices = @transform_5, window_bounds = array<i64: 128, 128>}, {pipeline_mode = #tpu.pipeline_mode<synchronous>, transform_indices = @transform_6, window_bounds = array<i64: 1, 128>}, {transform_indices = @transform_7, window_bounds = array<i64: 1, 128>}]} {
    %c0 = arith.constant 0 : index
    %c0_0 = arith.constant 0 : index
    %0 = vector.load %arg1[%c0, %c0_0] : memref<128x64xf32, #tpu.memory_space<vmem>>, vector<128x64xf32>
    %1 = arith.truncf %0 : vector<128x64xf32> to vector<128x64xbf16>
    %c0_1 = arith.constant 0 : index
    %c0_2 = arith.constant 0 : index
    %2 = vector.load %arg2[%c0_1, %c0_2] : memref<64x128xbf16, #tpu.memory_space<vmem>>, vector<64x128xbf16>
    %cst = arith.constant dense<0.000000e+00> : vector<128x128xf32>
    %3 = tpu.matmul %1, %2, %cst {dimension_numbers = #tpu.dot_dimension_numbers<[1], [0], [0], [1], [0, 0, 1, 1], [], []>} : vector<128x64xbf16>, vector<64x128xbf16>, vector<128x128xf32> -> vector<128x128xf32>
    %c0_3 = arith.constant 0 : index
    %c0_4 = arith.constant 0 : index
    %4 = vector.load %arg3[%c0_3, %c0_4] : memref<1x128xf32, #tpu.memory_space<vmem>>, vector<1x128xf32>
    %5 = vector.broadcast %4 : vector<1x128xf32> to vector<128x128xf32>
    %6 = arith.addf %3, %5 : vector<128x128xf32>
    %cst_5 = arith.constant 2.000000e+01 : f32
    %7 = vector.broadcast %cst_5 : f32 to vector<128x128xf32>
    %8 = arith.cmpf ogt, %6, %7 : vector<128x128xf32>
    %cst_6 = arith.constant 2.000000e+01 : f32
    %9 = vector.broadcast %cst_6 : f32 to vector<128x128xf32>
    %10 = arith.minimumf %6, %9 : vector<128x128xf32>
    %11 = math.exp %10 : vector<128x128xf32>
    %12 = math.log1p %11 : vector<128x128xf32>
    %13 = arith.select %8, %6, %12 : vector<128x128xi1>, vector<128x128xf32>
    %14 = arith.truncf %13 : vector<128x128xf32> to vector<128x128xbf16>
    %c0_7 = arith.constant 0 : index
    %c0_8 = arith.constant 0 : index
    %15 = vector.load %arg4[%c0_7, %c0_8] : memref<128x128xbf16, #tpu.memory_space<vmem>>, vector<128x128xbf16>
    %cst_9 = arith.constant dense<0.000000e+00> : vector<128x128xf32>
    %16 = tpu.matmul %14, %15, %cst_9 {dimension_numbers = #tpu.dot_dimension_numbers<[1], [0], [0], [1], [0, 0, 1, 1], [], []>} : vector<128x128xbf16>, vector<128x128xbf16>, vector<128x128xf32> -> vector<128x128xf32>
    %c0_10 = arith.constant 0 : index
    %c0_11 = arith.constant 0 : index
    %17 = vector.load %arg5[%c0_10, %c0_11] : memref<1x128xf32, #tpu.memory_space<vmem>>, vector<1x128xf32>
    %18 = vector.broadcast %17 : vector<1x128xf32> to vector<128x128xf32>
    %19 = arith.addf %16, %18 : vector<128x128xf32>
    %cst_12 = arith.constant 2.000000e+01 : f32
    %20 = vector.broadcast %cst_12 : f32 to vector<128x128xf32>
    %21 = arith.cmpf ogt, %19, %20 : vector<128x128xf32>
    %cst_13 = arith.constant 2.000000e+01 : f32
    %22 = vector.broadcast %cst_13 : f32 to vector<128x128xf32>
    %23 = arith.minimumf %19, %22 : vector<128x128xf32>
    %24 = math.exp %23 : vector<128x128xf32>
    %25 = math.log1p %24 : vector<128x128xf32>
    %26 = arith.select %21, %19, %25 : vector<128x128xi1>, vector<128x128xf32>
    %27 = arith.truncf %26 : vector<128x128xf32> to vector<128x128xbf16>
    %c0_14 = arith.constant 0 : index
    %c0_15 = arith.constant 0 : index
    %28 = vector.load %arg6[%c0_14, %c0_15] : memref<128x128xbf16, #tpu.memory_space<vmem>>, vector<128x128xbf16>
    %cst_16 = arith.constant dense<0.000000e+00> : vector<128x128xf32>
    %29 = tpu.matmul %27, %28, %cst_16 {dimension_numbers = #tpu.dot_dimension_numbers<[1], [0], [0], [1], [0, 0, 1, 1], [], []>} : vector<128x128xbf16>, vector<128x128xbf16>, vector<128x128xf32> -> vector<128x128xf32>
    %c0_17 = arith.constant 0 : index
    %c0_18 = arith.constant 0 : index
    %30 = vector.load %arg7[%c0_17, %c0_18] : memref<1x128xf32, #tpu.memory_space<vmem>>, vector<1x128xf32>
    %31 = vector.broadcast %30 : vector<1x128xf32> to vector<128x128xf32>
    %32 = arith.addf %29, %31 : vector<128x128xf32>
    %33 = tpu.transpose %32, [1, 0] : vector<128x128xf32> -> vector<128x128xf32>
    %34 = vector.extract_strided_slice %33 {offsets = [0, 0], sizes = [1, 128], strides = [1, 1]} : vector<128x128xf32> to vector<1x128xf32>
    %c0_19 = arith.constant 0 : index
    %c0_20 = arith.constant 0 : index
    %35 = vector.load %arg8[%c0_19, %c0_20] : memref<1x128xf32, #tpu.memory_space<vmem>>, vector<1x128xf32>
    tpu.vector_store %arg8[%c0_19, %c0_20], %34 {strides = array<i32>} : memref<1x128xf32, #tpu.memory_space<vmem>>, vector<1x128xf32>,
    return
  }
  func.func @transform_0(%arg0: i32) -> (i32, i32) {
    %c0_i32 = arith.constant 0 : i32
    %c0_i32_0 = arith.constant 0 : i32
    return %arg0, %c0_i32 : i32, i32
  }
  func.func @transform_1(%arg0: i32) -> (i32, i32) {
    %c0_i32 = arith.constant 0 : i32
    %c0_i32_0 = arith.constant 0 : i32
    %c0_i32_1 = arith.constant 0 : i32
    return %c0_i32, %c0_i32_0 : i32, i32
  }
  func.func @transform_2(%arg0: i32) -> (i32, i32) {
    %c0_i32 = arith.constant 0 : i32
    %c0_i32_0 = arith.constant 0 : i32
    %c0_i32_1 = arith.constant 0 : i32
    return %c0_i32, %c0_i32_0 : i32, i32
  }
  func.func @transform_3(%arg0: i32) -> (i32, i32) {
    %c0_i32 = arith.constant 0 : i32
    %c0_i32_0 = arith.constant 0 : i32
    %c0_i32_1 = arith.constant 0 : i32
    return %c0_i32, %c0_i32_0 : i32, i32
  }
  func.func @transform_4(%arg0: i32) -> (i32, i32) {
    %c0_i32 = arith.constant 0 : i32
    %c0_i32_0 = arith.constant 0 : i32
    %c0_i32_1 = arith.constant 0 : i32
    return %c0_i32, %c0_i32_0 : i32, i32
  }
  func.func @transform_5(%arg0: i32) -> (i32, i32) {
    %c0_i32 = arith.constant 0 : i32
    %c0_i32_0 = arith.constant 0 : i32
    %c0_i32_1 = arith.constant 0 : i32
    return %c0_i32, %c0_i32_0 : i32, i32
  }
  func.func @transform_6(%arg0: i32) -> (i32, i32) {
    %c0_i32 = arith.constant 0 : i32
    %c0_i32_0 = arith.constant 0 : i32
    %c0_i32_1 = arith.constant 0 : i32
    return %c0_i32, %c0_i32_0 : i32, i32
  }
  func.func @transform_7(%arg0: i32) -> (i32, i32) {
    %c0_i32 = arith.constant 0 : i32
    %c0_i32_0 = arith.constant 0 : i32
    return %c0_i32, %arg0 : i32, i32
  }
}

</mosaic_0001>

<llo_original>
// kernel: forward.1
$region0: #{forward.1}
  #allocation0 [shape = 'u32[]', space=smem, size = 0x4, offset = 0x4, fixed_abs, tag = 'smem constant byte address 0x4 - core index']
  #allocation1 [shape = 'u32[144,128]{1,0:T(1,128)}', space=vmem, size = 0x12000, scoped, tag = 'internal scratch']
  %s0 = inlined_call_operand.vmem [shape: f32[128,64], index: 0, kind: input, shape index: {}]
  %s1 = inlined_call_operand.hbm [shape: bf16[64,128], index: 1, kind: input, shape index: {}]
  %s2 = inlined_call_operand.vmem [shape: f32[1,128], index: 2, kind: input, shape index: {}]
  %s3 = inlined_call_operand.vmem [shape: bf16[128,128], index: 3, kind: input, shape index: {}]
  %s4 = inlined_call_operand.vmem [shape: f32[1,128], index: 4, kind: input, shape index: {}]
  %s5 = inlined_call_operand.vmem [shape: bf16[128,128], index: 5, kind: input, shape index: {}]
  %s6 = inlined_call_operand.vmem [shape: f32[1,128], index: 6, kind: input, shape index: {}]
  %s7 = inlined_call_operand.vmem [shape: f32[1,128], index: 7, kind: output, shape index: {}]
  %s8 = sld [smem:[#allocation0]]
  $region42: #{forward.1} parent=0
    _
  %s10 = ssub.s32 1, %s8
  %s11 = scalar_select 0, %s10, %s8
  $region1: #{forward.1} parent=0
    #allocation2 [shape = 'u8[16384]{0}', space=vmem, size = 0x4000, scoped, tag = 'input window, operand 1, single buffered']
    #allocation3 [shape = 's32[1]{0}', space=sflag, size = 0x4, scoped, tag = 'scoped memory for forward.1']
    %12 = vsyncpa [#allocation3], 0
    // Predicated region
    $region2: #{forward.1} parent=1 // pred_check
      _
    $region3: #{forward.1} parent=1 // pred_check_branch
      %14 = sbr.rel (0) target = $region5
    $region4: #{forward.1} parent=1 // pred_region
      _
    $region5: #{forward.1} parent=1 // pred_fallthru
      _
    // Predicated region
    $region6: #{forward.1} parent=1 // pred_check
      _
    $region7: #{forward.1} parent=1 // pred_check_branch
      %16 = sbr.rel (0) target = $region9
    $region8: #{forward.1} parent=1 // pred_region
      %s18 = ssub.s32 512, 512
      %19 = vsyncadd [#allocation3], %s18
      %s20 = sshll.u32 [#allocation2], 4
      %s21 = int_to_ptr.vmem [resolvable:$true] %s20
      %26 = dma.hbm_to_vmem [thread:$0]  %s1, 512, %s21, [#allocation3], 64, 64, 4
    $region9: #{forward.1} parent=1 // pred_fallthru
      _
    // Predicated region
    $region10: #{forward.1} parent=1 // pred_check
      _
    $region11: #{forward.1} parent=1 // pred_check_branch
      %28 = sbr.rel (0) target = $region13
    $region12: #{forward.1} parent=1 // pred_region
      _
    $region13: #{forward.1} parent=1 // pred_fallthru
      _
    // Predicated region
    $region14: #{forward.1} parent=1 // pred_check
      _
    $region15: #{forward.1} parent=1 // pred_check_branch
      %30 = sbr.rel (0) target = $region17
    $region16: #{forward.1} parent=1 // pred_region
      _
    $region17: #{forward.1} parent=1 // pred_fallthru
      _
    // Predicated region
    $region18: #{forward.1} parent=1 // pred_check
      _
    $region19: #{forward.1} parent=1 // pred_check_branch
      %32 = sbr.rel (0) target = $region21
    $region20: #{forward.1} parent=1 // pred_region
      _
    $region21: #{forward.1} parent=1 // pred_fallthru
      _
    // Predicated region
    $region22: #{forward.1} parent=1 // pred_check
      _
    $region23: #{forward.1} parent=1 // pred_check_branch
      %34 = sbr.rel (0) target = $region25
    $region24: #{forward.1} parent=1 // pred_region
      _
    $region25: #{forward.1} parent=1 // pred_fallthru
      _
    // Predicated region
    $region26: #{forward.1} parent=1 // pred_check
      _
    $region27: #{forward.1} parent=1 // pred_check_branch
      %36 = sbr.rel (0) target = $region29
    $region28: #{forward.1} parent=1 // pred_region
      _
    $region29: #{forward.1} parent=1 // pred_fallthru
      _
    // Predicated region
    $region30: #{forward.1} parent=1 // pred_check
      _
    $region31: #{forward.1} parent=1 // pred_check_branch
      %38 = sbr.rel (0) target = $region33
    $region32: #{forward.1} parent=1 // pred_region
      %39 = dma.done [#allocation3], 512
    $region33: #{forward.1} parent=1 // pred_fallthru
      _
    %v41 = vld [vmem:[%s0] sm:$0xff]
    %v42 = vld [vmem:[%s0 + $0x8] sm:$0xff]
    %v43 = vld [vmem:[%s0 + $0x10] sm:$0xff]
    %v44 = vld [vmem:[%s0 + $0x18] sm:$0xff]
    %v45 = vld [vmem:[%s0 + $0x20] sm:$0xff]
    %v46 = vld [vmem:[%s0 + $0x28] sm:$0xff]
    %v47 = vld [vmem:[%s0 + $0x30] sm:$0xff]
    %v48 = vld [vmem:[%s0 + $0x38] sm:$0xff]
    %v49 = vld [vmem:[%s0 + $0x40] sm:$0xff]
    %v50 = vld [vmem:[%s0 + $0x48] sm:$0xff]
    %v51 = vld [vmem:[%s0 + $0x50] sm:$0xff]
    %v52 = vld [vmem:[%s0 + $0x58] sm:$0xff]
    %v53 = vld [vmem:[%s0 + $0x60] sm:$0xff]
    %v54 = vld [vmem:[%s0 + $0x68] sm:$0xff]
    %v55 = vld [vmem:[%s0 + $0x70] sm:$0xff]
    %v56 = vld [vmem:[%s0 + $0x78] sm:$0xff]
    %v57 = vpack.c.bf16 %v42, %v41
    %v58 = vpack.c.bf16 %v44, %v43
    %v59 = vpack.c.bf16 %v46, %v45
    %v60 = vpack.c.bf16 %v48, %v47
    %v61 = vpack.c.bf16 %v50, %v49
    %v62 = vpack.c.bf16 %v52, %v51
    %v63 = vpack.c.bf16 %v54, %v53
    %v64 = vpack.c.bf16 %v56, %v55
    %v65 = vld [vmem:[#allocation2] sm:$0xf]
    %v66 = vld [vmem:[#allocation2 + $0x4] sm:$0xf]
    %v67 = vld [vmem:[#allocation2 + $0x8] sm:$0xf]
    %v68 = vld [vmem:[#allocation2 + $0xc] sm:$0xf]
    %v69 = vld [vmem:[#allocation2 + $0x10] sm:$0xf]
    %v70 = vld [vmem:[#allocation2 + $0x14] sm:$0xf]
    %v71 = vld [vmem:[#allocation2 + $0x18] sm:$0xf]
    %v72 = vld [vmem:[#allocation2 + $0x1c] sm:$0xf]
    %v73 = vld [vmem:[%s2] sm:$0x1]
    %v75 = vlaneseq
    %v76 = vshrl.u32 %v75, 7
    %v77 = vsub.s32 0, %v76
    %v78 = vrot.slane %v73, %v77
    %v88 = vunpack.c.l.b16 %v65
    %v89 = vunpack.c.l.b16 %v66
    %v90 = vunpack.c.l.b16 %v67
    %v91 = vunpack.c.l.b16 %v68
    %v92 = vunpack.c.l.b16 %v69
    %v93 = vunpack.c.l.b16 %v70
    %v94 = vunpack.c.l.b16 %v71
    %v95 = vunpack.c.l.b16 %v72
    %v96 = vpack.c.b16 %v89, %v88
    %v97 = vpack.c.b16 %v91, %v90
    %v98 = vpack.c.b16 %v93, %v92
    %v99 = vpack.c.b16 %v95, %v94
    %vm104 = vcmask 523264
    %v106 = vsel %vm104, %v57, 0
    %v109 = vsel %vm104, %v58, 0
    %v112 = vsel %vm104, %v59, 0
    %v115 = vsel %vm104, %v60, 0
    %v118 = vsel %vm104, %v61, 0
    %v121 = vsel %vm104, %v62, 0
    %v124 = vsel %vm104, %v63, 0
    %v127 = vsel %vm104, %v64, 0
    %129 = vmatprep.subr.bf16.mxu0 0
    %130 = vmatpush1.bf16.msra.mxu0 %v96
    %131 = vmatprep.subr.bf16.mxu0 0
    %132 = vmatpush1.bf16.msra.mxu0 %v97
    %133 = vmatprep.subr.bf16.mxu0 0
    %134 = vmatpush1.bf16.msra.mxu0 %v98
    %135 = vmatprep.subr.bf16.mxu0 0
    %136 = vmatpush1.bf16.msra.mxu0 %v99
    %137 = vmatprep.subr.bf16.mxu0 0
    %138 = vmatpush1.bf16.msra.mxu0 0
    %139 = vmatprep.subr.bf16.mxu0 0
    %140 = vmatpush1.bf16.msra.mxu0 0
    %141 = vmatprep.subr.bf16.mxu0 0
    %142 = vmatpush1.bf16.msra.mxu0 0
    %143 = vmatprep.subr.bf16.mxu0 0
    %144 = vmatpush1.bf16.msra.mxu0 0
    %145 = vmatprep.subr.bf16.mxu0 0
    %146 = vmatpush1.bf16.msra.mxu0 0
    %147 = vmatprep.subr.bf16.mxu0 0
    %148 = vmatpush1.bf16.msra.mxu0 0
    %149 = vmatprep.subr.bf16.mxu0 0
    %150 = vmatpush1.bf16.msra.mxu0 0
    %151 = vmatprep.subr.bf16.mxu0 0
    %152 = vmatpush1.bf16.msra.mxu0 0
    %153 = vmatprep.subr.bf16.mxu0 0
    %154 = vmatpush1.bf16.msra.mxu0 0
    %155 = vmatprep.subr.bf16.mxu0 0
    %156 = vmatpush1.bf16.msra.mxu0 0
    %157 = vmatprep.subr.bf16.mxu0 0
    %158 = vmatpush1.bf16.msra.mxu0 0
    %159 = vmatprep.subr.bf16.mxu0 0
    %160 = vmatpush1.bf16.msra.mxu0 0
    %161 = vmatprep.mubr.bf16.mxu0 0
    %162 = vmatmul.mubr.bf16.gmra.mrb[0].mxu0 %v106
    %v163 = vpop.f32.mrb[0].mxu0
    %v164 = vadd.f32 %v78, %v163
    %v165 = vpop.f32.mrb[0].mxu0
    %v166 = vpop.f32.mrb[0].mxu0
    %v167 = vadd.f32 %v78, %v166
    %v168 = vpop.f32.mrb[0].mxu0
    %169 = vmatprep.mubr.bf16.mxu0 0
    %170 = vmatmul.mubr.bf16.gmra.mrb[0].mxu0 %v109
    %v171 = vpop.f32.mrb[0].mxu0
    %v172 = vadd.f32 %v78, %v171
    %v173 = vpop.f32.mrb[0].mxu0
    %v174 = vpop.f32.mrb[0].mxu0
    %v175 = vadd.f32 %v78, %v174
    %v176 = vpop.f32.mrb[0].mxu0
    %177 = vmatprep.mubr.bf16.mxu0 0
    %178 = vmatmul.mubr.bf16.gmra.mrb[0].mxu0 %v112
    %v179 = vpop.f32.mrb[0].mxu0
    %v180 = vadd.f32 %v78, %v179
    %v181 = vpop.f32.mrb[0].mxu0
    %v182 = vpop.f32.mrb[0].mxu0
    %v183 = vadd.f32 %v78, %v182
    %v184 = vpop.f32.mrb[0].mxu0
    %185 = vmatprep.mubr.bf16.mxu0 0
    %186 = vmatmul.mubr.bf16.gmra.mrb[0].mxu0 %v115
    %v187 = vpop.f32.mrb[0].mxu0
    %v188 = vadd.f32 %v78, %v187
    %v189 = vpop.f32.mrb[0].mxu0
    %v190 = vpop.f32.mrb[0].mxu0
    %v191 = vadd.f32 %v78, %v190
    %v192 = vpop.f32.mrb[0].mxu0
    %193 = vmatprep.mubr.bf16.mxu0 0
    %194 = vmatmul.mubr.bf16.gmra.mrb[0].mxu0 %v118
    %v195 = vpop.f32.mrb[0].mxu0
    %v196 = vadd.f32 %v78, %v195
    %v197 = vpop.f32.mrb[0].mxu0
    %v198 = vpop.f32.mrb[0].mxu0
    %v199 = vadd.f32 %v78, %v198
    %v200 = vpop.f32.mrb[0].mxu0
    %201 = vmatprep.mubr.bf16.mxu0 0
    %202 = vmatmul.mubr.bf16.gmra.mrb[0].mxu0 %v121
    %v203 = vpop.f32.mrb[0].mxu0
    %v204 = vadd.f32 %v78, %v203
    %v205 = vpop.f32.mrb[0].mxu0
    %v206 = vpop.f32.mrb[0].mxu0
    %v207 = vadd.f32 %v78, %v206
    %v208 = vpop.f32.mrb[0].mxu0
    %209 = vmatprep.mubr.bf16.mxu0 0
    %210 = vmatmul.mubr.bf16.gmra.mrb[0].mxu0 %v124
    %v211 = vpop.f32.mrb[0].mxu0
    %v212 = vadd.f32 %v78, %v211
    %v213 = vpop.f32.mrb[0].mxu0
    %v214 = vpop.f32.mrb[0].mxu0
    %v215 = vadd.f32 %v78, %v214
    %v216 = vpop.f32.mrb[0].mxu0
    %217 = vmatprep.mubr.bf16.mxu0 0
    %218 = vmatmul.mubr.bf16.gmra.mrb[0].mxu0 %v127
    %v219 = vpop.f32.mrb[0].mxu0
    %v220 = vadd.f32 %v78, %v219
    %v221 = vpop.f32.mrb[0].mxu0
    %v222 = vpop.f32.mrb[0].mxu0
    %v223 = vadd.f32 %v78, %v222
    %v224 = vpop.f32.mrb[0].mxu0
    %225 = vdwg.mxu0
    %vm226 = vcmp.gt.f32.partialorder %v164, 20.0
    %vm227 = vcmp.gt.f32.partialorder %v167, 20.0
    %vm228 = vcmp.gt.f32.partialorder %v172, 20.0
    %vm229 = vcmp.gt.f32.partialorder %v175, 20.0
    %vm230 = vcmp.gt.f32.partialorder %v180, 20.0
    %vm231 = vcmp.gt.f32.partialorder %v183, 20.0
    %vm232 = vcmp.gt.f32.partialorder %v188, 20.0
    %vm233 = vcmp.gt.f32.partialorder %v191, 20.0
    %vm234 = vcmp.gt.f32.partialorder %v196, 20.0
    %vm235 = vcmp.gt.f32.partialorder %v199, 20.0
    %vm236 = vcmp.gt.f32.partialorder %v204, 20.0
    %vm237 = vcmp.gt.f32.partialorder %v207, 20.0
    %vm238 = vcmp.gt.f32.partialorder %v212, 20.0
    %vm239 = vcmp.gt.f32.partialorder %v215, 20.0
    %vm240 = vcmp.gt.f32.partialorder %v220, 20.0
    %vm241 = vcmp.gt.f32.partialorder %v223, 20.0
    %v242 = vmin.f32 %v164, 20.0
    %v243 = vmin.f32 %v167, 20.0
    %v244 = vmin.f32 %v172, 20.0
    %v245 = vmin.f32 %v175, 20.0
    %v246 = vmin.f32 %v180, 20.0
    %v247 = vmin.f32 %v183, 20.0
    %v248 = vmin.f32 %v188, 20.0
    %v249 = vmin.f32 %v191, 20.0
    %v250 = vmin.f32 %v196, 20.0
    %v251 = vmin.f32 %v199, 20.0
    %v252 = vmin.f32 %v204, 20.0
    %v253 = vmin.f32 %v207, 20.0
    %v254 = vmin.f32 %v212, 20.0
    %v255 = vmin.f32 %v215, 20.0
    %v256 = vmin.f32 %v220, 20.0
    %v257 = vmin.f32 %v223, 20.0
    %v258 = vmul.f32 %v242, 1.442695
    %v259 = vpow.pop %v258
    %v260 = vmul.f32 %v243, 1.442695
    %v261 = vpow.pop %v260
    %v262 = vmul.f32 %v244, 1.442695
    %v263 = vpow.pop %v262
    %v264 = vmul.f32 %v245, 1.442695
    %v265 = vpow.pop %v264
    %v266 = vmul.f32 %v246, 1.442695
    %v267 = vpow.pop %v266
    %v268 = vmul.f32 %v247, 1.442695
    %v269 = vpow.pop %v268
    %v270 = vmul.f32 %v248, 1.442695
    %v271 = vpow.pop %v270
    %v272 = vmul.f32 %v249, 1.442695
    %v273 = vpow.pop %v272
    %v274 = vmul.f32 %v250, 1.442695
    %v275 = vpow.pop %v274
    %v276 = vmul.f32 %v251, 1.442695
    %v277 = vpow.pop %v276
    %v278 = vmul.f32 %v252, 1.442695
    %v279 = vpow.pop %v278
    %v280 = vmul.f32 %v253, 1.442695
    %v281 = vpow.pop %v280
    %v282 = vmul.f32 %v254, 1.442695
    %v283 = vpow.pop %v282
    %v284 = vmul.f32 %v255, 1.442695
    %v285 = vpow.pop %v284
    %v286 = vmul.f32 %v256, 1.442695
    %v287 = vpow.pop %v286
    %v288 = vmul.f32 %v257, 1.442695
    %v289 = vpow.pop %v288
    %v290 = vadd.f32 %v259, 1.0
    %v291 = vlog2.pop %v290
    %v292 = vmul.f32 %v291, 0.6931472
    %v293 = vmul.f32 -0.5, %v259
    %v294 = vadd.f32 %v293, 1.0
    %v295 = vmul.f32 %v294, %v259
    %v296 = vand.u32 2147483647, %v259
    %vm297 = vcmp.lt.f32.partialorder %v296, 0.0004427343
    %v298 = vsel %vm297, %v295, %v292
    %v299 = vadd.f32 %v261, 1.0
    %v300 = vlog2.pop %v299
    %v301 = vmul.f32 %v300, 0.6931472
    %v302 = vmul.f32 -0.5, %v261
    %v303 = vadd.f32 %v302, 1.0
    %v304 = vmul.f32 %v303, %v261
    %v305 = vand.u32 2147483647, %v261
    %vm306 = vcmp.lt.f32.partialorder %v305, 0.0004427343
    %v307 = vsel %vm306, %v304, %v301
    %v308 = vadd.f32 %v263, 1.0
    %v309 = vlog2.pop %v308
    %v310 = vmul.f32 %v309, 0.6931472
    %v311 = vmul.f32 -0.5, %v263
    %v312 = vadd.f32 %v311, 1.0
    %v313 = vmul.f32 %v312, %v263
    %v314 = vand.u32 2147483647, %v263
    %vm315 = vcmp.lt.f32.partialorder %v314, 0.0004427343
    %v316 = vsel %vm315, %v313, %v310
    %v317 = vadd.f32 %v265, 1.0
    %v318 = vlog2.pop %v317
    %v319 = vmul.f32 %v318, 0.6931472
    %v320 = vmul.f32 -0.5, %v265
    %v321 = vadd.f32 %v320, 1.0
    %v322 = vmul.f32 %v321, %v265
    %v323 = vand.u32 2147483647, %v265
    %vm324 = vcmp.lt.f32.partialorder %v323, 0.0004427343
    %v325 = vsel %vm324, %v322, %v319
    %v326 = vadd.f32 %v267, 1.0
    %v327 = vlog2.pop %v326
    %v328 = vmul.f32 %v327, 0.6931472
    %v329 = vmul.f32 -0.5, %v267
    %v330 = vadd.f32 %v329, 1.0
    %v331 = vmul.f32 %v330, %v267
    %v332 = vand.u32 2147483647, %v267
    %vm333 = vcmp.lt.f32.partialorder %v332, 0.0004427343
    %v334 = vsel %vm333, %v331, %v328
    %v335 = vadd.f32 %v269, 1.0
    %v336 = vlog2.pop %v335
    %v337 = vmul.f32 %v336, 0.6931472
    %v338 = vmul.f32 -0.5, %v269
    %v339 = vadd.f32 %v338, 1.0
    %v340 = vmul.f32 %v339, %v269
    %v341 = vand.u32 2147483647, %v269
    %vm342 = vcmp.lt.f32.partialorder %v341, 0.0004427343
    %v343 = vsel %vm342, %v340, %v337
    %v344 = vadd.f32 %v271, 1.0
    %v345 = vlog2.pop %v344
    %v346 = vmul.f32 %v345, 0.6931472
    %v347 = vmul.f32 -0.5, %v271
    %v348 = vadd.f32 %v347, 1.0
    %v349 = vmul.f32 %v348, %v271
    %v350 = vand.u32 2147483647, %v271
    %vm351 = vcmp.lt.f32.partialorder %v350, 0.0004427343
    %v352 = vsel %vm351, %v349, %v346
    %v353 = vadd.f32 %v273, 1.0
    %v354 = vlog2.pop %v353
    %v355 = vmul.f32 %v354, 0.6931472
    %v356 = vmul.f32 -0.5, %v273
    %v357 = vadd.f32 %v356, 1.0
    %v358 = vmul.f32 %v357, %v273
    %v359 = vand.u32 2147483647, %v273
    %vm360 = vcmp.lt.f32.partialorder %v359, 0.0004427343
    %v361 = vsel %vm360, %v358, %v355
    %v362 = vadd.f32 %v275, 1.0
    %v363 = vlog2.pop %v362
    %v364 = vmul.f32 %v363, 0.6931472
    %v365 = vmul.f32 -0.5, %v275
    %v366 = vadd.f32 %v365, 1.0
    %v367 = vmul.f32 %v366, %v275
    %v368 = vand.u32 2147483647, %v275
    %vm369 = vcmp.lt.f32.partialorder %v368, 0.0004427343
    %v370 = vsel %vm369, %v367, %v364
    %v371 = vadd.f32 %v277, 1.0
    %v372 = vlog2.pop %v371
    %v373 = vmul.f32 %v372, 0.6931472
    %v374 = vmul.f32 -0.5, %v277
    %v375 = vadd.f32 %v374, 1.0
    %v376 = vmul.f32 %v375, %v277
    %v377 = vand.u32 2147483647, %v277
    %vm378 = vcmp.lt.f32.partialorder %v377, 0.0004427343
    %v379 = vsel %vm378, %v376, %v373
    %v380 = vadd.f32 %v279, 1.0
    %v381 = vlog2.pop %v380
    %v382 = vmul.f32 %v381, 0.6931472
    %v383 = vmul.f32 -0.5, %v279
    %v384 = vadd.f32 %v383, 1.0
    %v385 = vmul.f32 %v384, %v279
    %v386 = vand.u32 2147483647, %v279
    %vm387 = vcmp.lt.f32.partialorder %v386, 0.0004427343
    %v388 = vsel %vm387, %v385, %v382
    %v389 = vadd.f32 %v281, 1.0
    %v390 = vlog2.pop %v389
    %v391 = vmul.f32 %v390, 0.6931472
    %v392 = vmul.f32 -0.5, %v281
    %v393 = vadd.f32 %v392, 1.0
    %v394 = vmul.f32 %v393, %v281
    %v395 = vand.u32 2147483647, %v281
    %vm396 = vcmp.lt.f32.partialorder %v395, 0.0004427343
    %v397 = vsel %vm396, %v394, %v391
    %v398 = vadd.f32 %v283, 1.0
    %v399 = vlog2.pop %v398
    %v400 = vmul.f32 %v399, 0.6931472
    %v401 = vmul.f32 -0.5, %v283
    %v402 = vadd.f32 %v401, 1.0
    %v403 = vmul.f32 %v402, %v283
    %v404 = vand.u32 2147483647, %v283
    %vm405 = vcmp.lt.f32.partialorder %v404, 0.0004427343
    %v406 = vsel %vm405, %v403, %v400
    %v407 = vadd.f32 %v285, 1.0
    %v408 = vlog2.pop %v407
    %v409 = vmul.f32 %v408, 0.6931472
    %v410 = vmul.f32 -0.5, %v285
    %v411 = vadd.f32 %v410, 1.0
    %v412 = vmul.f32 %v411, %v285
    %v413 = vand.u32 2147483647, %v285
    %vm414 = vcmp.lt.f32.partialorder %v413, 0.0004427343
    %v415 = vsel %vm414, %v412, %v409
    %v416 = vadd.f32 %v287, 1.0
    %v417 = vlog2.pop %v416
    %v418 = vmul.f32 %v417, 0.6931472
    %v419 = vmul.f32 -0.5, %v287
    %v420 = vadd.f32 %v419, 1.0
    %v421 = vmul.f32 %v420, %v287
    %v422 = vand.u32 2147483647, %v287
    %vm423 = vcmp.lt.f32.partialorder %v422, 0.0004427343
    %v424 = vsel %vm423, %v421, %v418
    %v425 = vadd.f32 %v289, 1.0
    %v426 = vlog2.pop %v425
    %v427 = vmul.f32 %v426, 0.6931472
    %v428 = vmul.f32 -0.5, %v289
    %v429 = vadd.f32 %v428, 1.0
    %v430 = vmul.f32 %v429, %v289
    %v431 = vand.u32 2147483647, %v289
    %vm432 = vcmp.lt.f32.partialorder %v431, 0.0004427343
    %v433 = vsel %vm432, %v430, %v427
    %v434 = vsel %vm226, %v164, %v298
    %v435 = vsel %vm227, %v167, %v307
    %v436 = vsel %vm228, %v172, %v316
    %v437 = vsel %vm229, %v175, %v325
    %v438 = vsel %vm230, %v180, %v334
    %v439 = vsel %vm231, %v183, %v343
    %v440 = vsel %vm232, %v188, %v352
    %v441 = vsel %vm233, %v191, %v361
    %v442 = vsel %vm234, %v196, %v370
    %v443 = vsel %vm235, %v199, %v379
    %v444 = vsel %vm236, %v204, %v388
    %v445 = vsel %vm237, %v207, %v397
    %v446 = vsel %vm238, %v212, %v406
    %v447 = vsel %vm239, %v215, %v415
    %v448 = vsel %vm240, %v220, %v424
    %v449 = vsel %vm241, %v223, %v433
    %v450 = vpack.c.bf16 %v435, %v434
    %v451 = vpack.c.bf16 %v437, %v436
    %v452 = vpack.c.bf16 %v439, %v438
    %v453 = vpack.c.bf16 %v441, %v440
    %v454 = vpack.c.bf16 %v443, %v442
    %v455 = vpack.c.bf16 %v445, %v444
    %v456 = vpack.c.bf16 %v447, %v446
    %v457 = vpack.c.bf16 %v449, %v448
    %v458 = vld [vmem:[%s3] sm:$0xf]
    %v459 = vld [vmem:[%s3 + $0x4] sm:$0xf]
    %v460 = vld [vmem:[%s3 + $0x8] sm:$0xf]
    %v461 = vld [vmem:[%s3 + $0xc] sm:$0xf]
    %v462 = vld [vmem:[%s3 + $0x10] sm:$0xf]
    %v463 = vld [vmem:[%s3 + $0x14] sm:$0xf]
    %v464 = vld [vmem:[%s3 + $0x18] sm:$0xf]
    %v465 = vld [vmem:[%s3 + $0x1c] sm:$0xf]
    %v466 = vld [vmem:[%s3 + $0x20] sm:$0xf]
    %v467 = vld [vmem:[%s3 + $0x24] sm:$0xf]
    %v468 = vld [vmem:[%s3 + $0x28] sm:$0xf]
    %v469 = vld [vmem:[%s3 + $0x2c] sm:$0xf]
    %v470 = vld [vmem:[%s3 + $0x30] sm:$0xf]
    %v471 = vld [vmem:[%s3 + $0x34] sm:$0xf]
    %v472 = vld [vmem:[%s3 + $0x38] sm:$0xf]
    %v473 = vld [vmem:[%s3 + $0x3c] sm:$0xf]
    %v474 = vld [vmem:[%s4] sm:$0x1]
    %v476 = vlaneseq
    %v477 = vshrl.u32 %v476, 7
    %v478 = vsub.s32 0, %v477
    %v479 = vrot.slane %v474, %v478
    %v497 = vunpack.c.l.b16 %v458
    %v498 = vunpack.c.l.b16 %v459
    %v499 = vunpack.c.l.b16 %v460
    %v500 = vunpack.c.l.b16 %v461
    %v501 = vunpack.c.l.b16 %v462
    %v502 = vunpack.c.l.b16 %v463
    %v503 = vunpack.c.l.b16 %v464
    %v504 = vunpack.c.l.b16 %v465
    %v505 = vunpack.c.l.b16 %v466
    %v506 = vunpack.c.l.b16 %v467
    %v507 = vunpack.c.l.b16 %v468
    %v508 = vunpack.c.l.b16 %v469
    %v509 = vunpack.c.l.b16 %v470
    %v510 = vunpack.c.l.b16 %v471
    %v511 = vunpack.c.l.b16 %v472
    %v512 = vunpack.c.l.b16 %v473
    %v513 = vpack.c.b16 %v498, %v497
    %v514 = vpack.c.b16 %v500, %v499
    %v515 = vpack.c.b16 %v502, %v501
    %v516 = vpack.c.b16 %v504, %v503
    %v517 = vpack.c.b16 %v506, %v505
    %v518 = vpack.c.b16 %v508, %v507
    %v519 = vpack.c.b16 %v510, %v509
    %v520 = vpack.c.b16 %v512, %v511
    %529 = vmatprep.subr.bf16.mxu0 0
    %530 = vmatpush1.bf16.msra.mxu0 %v513
    %531 = vmatprep.subr.bf16.mxu0 0
    %532 = vmatpush1.bf16.msra.mxu0 %v514
    %533 = vmatprep.subr.bf16.mxu0 0
    %534 = vmatpush1.bf16.msra.mxu0 %v515
    %535 = vmatprep.subr.bf16.mxu0 0
    %536 = vmatpush1.bf16.msra.mxu0 %v516
    %537 = vmatprep.subr.bf16.mxu0 0
    %538 = vmatpush1.bf16.msra.mxu0 %v517
    %539 = vmatprep.subr.bf16.mxu0 0
    %540 = vmatpush1.bf16.msra.mxu0 %v518
    %541 = vmatprep.subr.bf16.mxu0 0
    %542 = vmatpush1.bf16.msra.mxu0 %v519
    %543 = vmatprep.subr.bf16.mxu0 0
    %544 = vmatpush1.bf16.msra.mxu0 %v520
    %545 = vmatprep.subr.bf16.mxu0 0
    %546 = vmatpush1.bf16.msra.mxu0 0
    %547 = vmatprep.subr.bf16.mxu0 0
    %548 = vmatpush1.bf16.msra.mxu0 0
    %549 = vmatprep.subr.bf16.mxu0 0
    %550 = vmatpush1.bf16.msra.mxu0 0
    %551 = vmatprep.subr.bf16.mxu0 0
    %552 = vmatpush1.bf16.msra.mxu0 0
    %553 = vmatprep.subr.bf16.mxu0 0
    %554 = vmatpush1.bf16.msra.mxu0 0
    %555 = vmatprep.subr.bf16.mxu0 0
    %556 = vmatpush1.bf16.msra.mxu0 0
    %557 = vmatprep.subr.bf16.mxu0 0
    %558 = vmatpush1.bf16.msra.mxu0 0
    %559 = vmatprep.subr.bf16.mxu0 0
    %560 = vmatpush1.bf16.msra.mxu0 0
    %561 = vmatprep.mubr.bf16.mxu0 0
    %562 = vmatmul.mubr.bf16.gmra.mrb[0].mxu0 %v450
    %v563 = vpop.f32.mrb[0].mxu0
    %v564 = vadd.f32 %v479, %v563
    %v565 = vpop.f32.mrb[0].mxu0
    %v566 = vpop.f32.mrb[0].mxu0
    %v567 = vadd.f32 %v479, %v566
    %v568 = vpop.f32.mrb[0].mxu0
    %569 = vmatprep.mubr.bf16.mxu0 0
    %570 = vmatmul.mubr.bf16.gmra.mrb[0].mxu0 %v451
    %v571 = vpop.f32.mrb[0].mxu0
    %v572 = vadd.f32 %v479, %v571
    %v573 = vpop.f32.mrb[0].mxu0
    %v574 = vpop.f32.mrb[0].mxu0
    %v575 = vadd.f32 %v479, %v574
    %v576 = vpop.f32.mrb[0].mxu0
    %577 = vmatprep.mubr.bf16.mxu0 0
    %578 = vmatmul.mubr.bf16.gmra.mrb[0].mxu0 %v452
    %v579 = vpop.f32.mrb[0].mxu0
    %v580 = vadd.f32 %v479, %v579
    %v581 = vpop.f32.mrb[0].mxu0
    %v582 = vpop.f32.mrb[0].mxu0
    %v583 = vadd.f32 %v479, %v582
    %v584 = vpop.f32.mrb[0].mxu0
    %585 = vmatprep.mubr.bf16.mxu0 0
    %586 = vmatmul.mubr.bf16.gmra.mrb[0].mxu0 %v453
    %v587 = vpop.f32.mrb[0].mxu0
    %v588 = vadd.f32 %v479, %v587
    %v589 = vpop.f32.mrb[0].mxu0
    %v590 = vpop.f32.mrb[0].mxu0
    %v591 = vadd.f32 %v479, %v590
    %v592 = vpop.f32.mrb[0].mxu0
    %593 = vmatprep.mubr.bf16.mxu0 0
    %594 = vmatmul.mubr.bf16.gmra.mrb[0].mxu0 %v454
    %v595 = vpop.f32.mrb[0].mxu0
    %v596 = vadd.f32 %v479, %v595
    %v597 = vpop.f32.mrb[0].mxu0
    %v598 = vpop.f32.mrb[0].mxu0
    %v599 = vadd.f32 %v479, %v598
    %v600 = vpop.f32.mrb[0].mxu0
    %601 = vmatprep.mubr.bf16.mxu0 0
    %602 = vmatmul.mubr.bf16.gmra.mrb[0].mxu0 %v455
    %v603 = vpop.f32.mrb[0].mxu0
    %v604 = vadd.f32 %v479, %v603
    %v605 = vpop.f32.mrb[0].mxu0
    %v606 = vpop.f32.mrb[0].mxu0
    %v607 = vadd.f32 %v479, %v606
    %v608 = vpop.f32.mrb[0].mxu0
    %609 = vmatprep.mubr.bf16.mxu0 0
    %610 = vmatmul.mubr.bf16.gmra.mrb[0].mxu0 %v456
    %v611 = vpop.f32.mrb[0].mxu0
    %v612 = vadd.f32 %v479, %v611
    %v613 = vpop.f32.mrb[0].mxu0
    %v614 = vpop.f32.mrb[0].mxu0
    %v615 = vadd.f32 %v479, %v614
    %v616 = vpop.f32.mrb[0].mxu0
    %617 = vmatprep.mubr.bf16.mxu0 0
    %618 = vmatmul.mubr.bf16.gmra.mrb[0].mxu0 %v457
    %v619 = vpop.f32.mrb[0].mxu0
    %v620 = vadd.f32 %v479, %v619
    %v621 = vpop.f32.mrb[0].mxu0
    %v622 = vpop.f32.mrb[0].mxu0
    %v623 = vadd.f32 %v479, %v622
    %v624 = vpop.f32.mrb[0].mxu0
    %625 = vdwg.mxu0
    %vm626 = vcmp.gt.f32.partialorder %v564, 20.0
    %vm627 = vcmp.gt.f32.partialorder %v567, 20.0
    %vm628 = vcmp.gt.f32.partialorder %v572, 20.0
    %vm629 = vcmp.gt.f32.partialorder %v575, 20.0
    %vm630 = vcmp.gt.f32.partialorder %v580, 20.0
    %vm631 = vcmp.gt.f32.partialorder %v583, 20.0
    %vm632 = vcmp.gt.f32.partialorder %v588, 20.0
    %vm633 = vcmp.gt.f32.partialorder %v591, 20.0
    %vm634 = vcmp.gt.f32.partialorder %v596, 20.0
    %vm635 = vcmp.gt.f32.partialorder %v599, 20.0
    %vm636 = vcmp.gt.f32.partialorder %v604, 20.0
    %vm637 = vcmp.gt.f32.partialorder %v607, 20.0
    %vm638 = vcmp.gt.f32.partialorder %v612, 20.0
    %vm639 = vcmp.gt.f32.partialorder %v615, 20.0
    %vm640 = vcmp.gt.f32.partialorder %v620, 20.0
    %vm641 = vcmp.gt.f32.partialorder %v623, 20.0
    %v642 = vmin.f32 %v564, 20.0
    %v643 = vmin.f32 %v567, 20.0
    %v644 = vmin.f32 %v572, 20.0
    %v645 = vmin.f32 %v575, 20.0
    %v646 = vmin.f32 %v580, 20.0
    %v647 = vmin.f32 %v583, 20.0
    %v648 = vmin.f32 %v588, 20.0
    %v649 = vmin.f32 %v591, 20.0
    %v650 = vmin.f32 %v596, 20.0
    %v651 = vmin.f32 %v599, 20.0
    %v652 = vmin.f32 %v604, 20.0
    %v653 = vmin.f32 %v607, 20.0
    %v654 = vmin.f32 %v612, 20.0
    %v655 = vmin.f32 %v615, 20.0
    %v656 = vmin.f32 %v620, 20.0
    %v657 = vmin.f32 %v623, 20.0
    %v658 = vmul.f32 %v642, 1.442695
    %v659 = vpow.pop %v658
    %v660 = vmul.f32 %v643, 1.442695
    %v661 = vpow.pop %v660
    %v662 = vmul.f32 %v644, 1.442695
    %v663 = vpow.pop %v662
    %v664 = vmul.f32 %v645, 1.442695
    %v665 = vpow.pop %v664
    %v666 = vmul.f32 %v646, 1.442695
    %v667 = vpow.pop %v666
    %v668 = vmul.f32 %v647, 1.442695
    %v669 = vpow.pop %v668
    %v670 = vmul.f32 %v648, 1.442695
    %v671 = vpow.pop %v670
    %v672 = vmul.f32 %v649, 1.442695
    %v673 = vpow.pop %v672
    %v674 = vmul.f32 %v650, 1.442695
    %v675 = vpow.pop %v674
    %v676 = vmul.f32 %v651, 1.442695
    %v677 = vpow.pop %v676
    %v678 = vmul.f32 %v652, 1.442695
    %v679 = vpow.pop %v678
    %v680 = vmul.f32 %v653, 1.442695
    %v681 = vpow.pop %v680
    %v682 = vmul.f32 %v654, 1.442695
    %v683 = vpow.pop %v682
    %v684 = vmul.f32 %v655, 1.442695
    %v685 = vpow.pop %v684
    %v686 = vmul.f32 %v656, 1.442695
    %v687 = vpow.pop %v686
    %v688 = vmul.f32 %v657, 1.442695
    %v689 = vpow.pop %v688
    %v690 = vadd.f32 %v659, 1.0
    %v691 = vlog2.pop %v690
    %v692 = vmul.f32 %v691, 0.6931472
    %v693 = vmul.f32 -0.5, %v659
    %v694 = vadd.f32 %v693, 1.0
    %v695 = vmul.f32 %v694, %v659
    %v696 = vand.u32 2147483647, %v659
    %vm697 = vcmp.lt.f32.partialorder %v696, 0.0004427343
    %v698 = vsel %vm697, %v695, %v692
    %v699 = vadd.f32 %v661, 1.0
    %v700 = vlog2.pop %v699
    %v701 = vmul.f32 %v700, 0.6931472
    %v702 = vmul.f32 -0.5, %v661
    %v703 = vadd.f32 %v702, 1.0
    %v704 = vmul.f32 %v703, %v661
    %v705 = vand.u32 2147483647, %v661
    %vm706 = vcmp.lt.f32.partialorder %v705, 0.0004427343
    %v707 = vsel %vm706, %v704, %v701
    %v708 = vadd.f32 %v663, 1.0
    %v709 = vlog2.pop %v708
    %v710 = vmul.f32 %v709, 0.6931472
    %v711 = vmul.f32 -0.5, %v663
    %v712 = vadd.f32 %v711, 1.0
    %v713 = vmul.f32 %v712, %v663
    %v714 = vand.u32 2147483647, %v663
    %vm715 = vcmp.lt.f32.partialorder %v714, 0.0004427343
    %v716 = vsel %vm715, %v713, %v710
    %v717 = vadd.f32 %v665, 1.0
    %v718 = vlog2.pop %v717
    %v719 = vmul.f32 %v718, 0.6931472
    %v720 = vmul.f32 -0.5, %v665
    %v721 = vadd.f32 %v720, 1.0
    %v722 = vmul.f32 %v721, %v665
    %v723 = vand.u32 2147483647, %v665
    %vm724 = vcmp.lt.f32.partialorder %v723, 0.0004427343
    %v725 = vsel %vm724, %v722, %v719
    %v726 = vadd.f32 %v667, 1.0
    %v727 = vlog2.pop %v726
    %v728 = vmul.f32 %v727, 0.6931472
    %v729 = vmul.f32 -0.5, %v667
    %v730 = vadd.f32 %v729, 1.0
    %v731 = vmul.f32 %v730, %v667
    %v732 = vand.u32 2147483647, %v667
    %vm733 = vcmp.lt.f32.partialorder %v732, 0.0004427343
    %v734 = vsel %vm733, %v731, %v728
    %v735 = vadd.f32 %v669, 1.0
    %v736 = vlog2.pop %v735
    %v737 = vmul.f32 %v736, 0.6931472
    %v738 = vmul.f32 -0.5, %v669
    %v739 = vadd.f32 %v738, 1.0
    %v740 = vmul.f32 %v739, %v669
    %v741 = vand.u32 2147483647, %v669
    %vm742 = vcmp.lt.f32.partialorder %v741, 0.0004427343
    %v743 = vsel %vm742, %v740, %v737
    %v744 = vadd.f32 %v671, 1.0
    %v745 = vlog2.pop %v744
    %v746 = vmul.f32 %v745, 0.6931472
    %v747 = vmul.f32 -0.5, %v671
    %v748 = vadd.f32 %v747, 1.0
    %v749 = vmul.f32 %v748, %v671
    %v750 = vand.u32 2147483647, %v671
    %vm751 = vcmp.lt.f32.partialorder %v750, 0.0004427343
    %v752 = vsel %vm751, %v749, %v746
    %v753 = vadd.f32 %v673, 1.0
    %v754 = vlog2.pop %v753
    %v755 = vmul.f32 %v754, 0.6931472
    %v756 = vmul.f32 -0.5, %v673
    %v757 = vadd.f32 %v756, 1.0
    %v758 = vmul.f32 %v757, %v673
    %v759 = vand.u32 2147483647, %v673
    %vm760 = vcmp.lt.f32.partialorder %v759, 0.0004427343
    %v761 = vsel %vm760, %v758, %v755
    %v762 = vadd.f32 %v675, 1.0
    %v763 = vlog2.pop %v762
    %v764 = vmul.f32 %v763, 0.6931472
    %v765 = vmul.f32 -0.5, %v675
    %v766 = vadd.f32 %v765, 1.0
    %v767 = vmul.f32 %v766, %v675
    %v768 = vand.u32 2147483647, %v675
    %vm769 = vcmp.lt.f32.partialorder %v768, 0.0004427343
    %v770 = vsel %vm769, %v767, %v764
    %v771 = vadd.f32 %v677, 1.0
    %v772 = vlog2.pop %v771
    %v773 = vmul.f32 %v772, 0.6931472
    %v774 = vmul.f32 -0.5, %v677
    %v775 = vadd.f32 %v774, 1.0
    %v776 = vmul.f32 %v775, %v677
    %v777 = vand.u32 2147483647, %v677
    %vm778 = vcmp.lt.f32.partialorder %v777, 0.0004427343
    %v779 = vsel %vm778, %v776, %v773
    %v780 = vadd.f32 %v679, 1.0
    %v781 = vlog2.pop %v780
    %v782 = vmul.f32 %v781, 0.6931472
    %v783 = vmul.f32 -0.5, %v679
    %v784 = vadd.f32 %v783, 1.0
    %v785 = vmul.f32 %v784, %v679
    %v786 = vand.u32 2147483647, %v679
    %vm787 = vcmp.lt.f32.partialorder %v786, 0.0004427343
    %v788 = vsel %vm787, %v785, %v782
    %v789 = vadd.f32 %v681, 1.0
    %v790 = vlog2.pop %v789
    %v791 = vmul.f32 %v790, 0.6931472
    %v792 = vmul.f32 -0.5, %v681
    %v793 = vadd.f32 %v792, 1.0
    %v794 = vmul.f32 %v793, %v681
    %v795 = vand.u32 2147483647, %v681
    %vm796 = vcmp.lt.f32.partialorder %v795, 0.0004427343
    %v797 = vsel %vm796, %v794, %v791
    %v798 = vadd.f32 %v683, 1.0
    %v799 = vlog2.pop %v798
    %v800 = vmul.f32 %v799, 0.6931472
    %v801 = vmul.f32 -0.5, %v683
    %v802 = vadd.f32 %v801, 1.0
    %v803 = vmul.f32 %v802, %v683
    %v804 = vand.u32 2147483647, %v683
    %vm805 = vcmp.lt.f32.partialorder %v804, 0.0004427343
    %v806 = vsel %vm805, %v803, %v800
    %v807 = vadd.f32 %v685, 1.0
    %v808 = vlog2.pop %v807
    %v809 = vmul.f32 %v808, 0.6931472
    %v810 = vmul.f32 -0.5, %v685
    %v811 = vadd.f32 %v810, 1.0
    %v812 = vmul.f32 %v811, %v685
    %v813 = vand.u32 2147483647, %v685
    %vm814 = vcmp.lt.f32.partialorder %v813, 0.0004427343
    %v815 = vsel %vm814, %v812, %v809
    %v816 = vadd.f32 %v687, 1.0
    %v817 = vlog2.pop %v816
    %v818 = vmul.f32 %v817, 0.6931472
    %v819 = vmul.f32 -0.5, %v687
    %v820 = vadd.f32 %v819, 1.0
    %v821 = vmul.f32 %v820, %v687
    %v822 = vand.u32 2147483647, %v687
    %vm823 = vcmp.lt.f32.partialorder %v822, 0.0004427343
    %v824 = vsel %vm823, %v821, %v818
    %v825 = vadd.f32 %v689, 1.0
    %v826 = vlog2.pop %v825
    %v827 = vmul.f32 %v826, 0.6931472
    %v828 = vmul.f32 -0.5, %v689
    %v829 = vadd.f32 %v828, 1.0
    %v830 = vmul.f32 %v829, %v689
    %v831 = vand.u32 2147483647, %v689
    %vm832 = vcmp.lt.f32.partialorder %v831, 0.0004427343
    %v833 = vsel %vm832, %v830, %v827
    %v834 = vsel %vm626, %v564, %v698
    %v835 = vsel %vm627, %v567, %v707
    %v836 = vsel %vm628, %v572, %v716
    %v837 = vsel %vm629, %v575, %v725
    %v838 = vsel %vm630, %v580, %v734
    %v839 = vsel %vm631, %v583, %v743
    %v840 = vsel %vm632, %v588, %v752
    %v841 = vsel %vm633, %v591, %v761
    %v842 = vsel %vm634, %v596, %v770
    %v843 = vsel %vm635, %v599, %v779
    %v844 = vsel %vm636, %v604, %v788
    %v845 = vsel %vm637, %v607, %v797
    %v846 = vsel %vm638, %v612, %v806
    %v847 = vsel %vm639, %v615, %v815
    %v848 = vsel %vm640, %v620, %v824
    %v849 = vsel %vm641, %v623, %v833
    %v850 = vpack.c.bf16 %v835, %v834
    %v851 = vpack.c.bf16 %v837, %v836
    %v852 = vpack.c.bf16 %v839, %v838
    %v853 = vpack.c.bf16 %v841, %v840
    %v854 = vpack.c.bf16 %v843, %v842
    %v855 = vpack.c.bf16 %v845, %v844
    %v856 = vpack.c.bf16 %v847, %v846
    %v857 = vpack.c.bf16 %v849, %v848
    %v858 = vld [vmem:[%s5] sm:$0xf]
    %v859 = vld [vmem:[%s5 + $0x4] sm:$0xf]
    %v860 = vld [vmem:[%s5 + $0x8] sm:$0xf]
    %v861 = vld [vmem:[%s5 + $0xc] sm:$0xf]
    %v862 = vld [vmem:[%s5 + $0x10] sm:$0xf]
    %v863 = vld [vmem:[%s5 + $0x14] sm:$0xf]
    %v864 = vld [vmem:[%s5 + $0x18] sm:$0xf]
    %v865 = vld [vmem:[%s5 + $0x1c] sm:$0xf]
    %v866 = vld [vmem:[%s5 + $0x20] sm:$0xf]
    %v867 = vld [vmem:[%s5 + $0x24] sm:$0xf]
    %v868 = vld [vmem:[%s5 + $0x28] sm:$0xf]
    %v869 = vld [vmem:[%s5 + $0x2c] sm:$0xf]
    %v870 = vld [vmem:[%s5 + $0x30] sm:$0xf]
    %v871 = vld [vmem:[%s5 + $0x34] sm:$0xf]
    %v872 = vld [vmem:[%s5 + $0x38] sm:$0xf]
    %v873 = vld [vmem:[%s5 + $0x3c] sm:$0xf]
    %v874 = vld [vmem:[%s6] sm:$0x1]
    %v876 = vlaneseq
    %v877 = vshrl.u32 %v876, 7
    %v878 = vsub.s32 0, %v877
    %v879 = vrot.slane %v874, %v878
    %v897 = vunpack.c.l.b16 %v858
    %v898 = vunpack.c.l.b16 %v859
    %v899 = vunpack.c.l.b16 %v860
    %v900 = vunpack.c.l.b16 %v861
    %v901 = vunpack.c.l.b16 %v862
    %v902 = vunpack.c.l.b16 %v863
    %v903 = vunpack.c.l.b16 %v864
    %v904 = vunpack.c.l.b16 %v865
    %v905 = vunpack.c.l.b16 %v866
    %v906 = vunpack.c.l.b16 %v867
    %v907 = vunpack.c.l.b16 %v868
    %v908 = vunpack.c.l.b16 %v869
    %v909 = vunpack.c.l.b16 %v870
    %v910 = vunpack.c.l.b16 %v871
    %v911 = vunpack.c.l.b16 %v872
    %v912 = vunpack.c.l.b16 %v873
    %v913 = vpack.c.b16 %v898, %v897
    %v914 = vpack.c.b16 %v900, %v899
    %v915 = vpack.c.b16 %v902, %v901
    %v916 = vpack.c.b16 %v904, %v903
    %v917 = vpack.c.b16 %v906, %v905
    %v918 = vpack.c.b16 %v908, %v907
    %v919 = vpack.c.b16 %v910, %v909
    %v920 = vpack.c.b16 %v912, %v911
    %929 = vmatprep.subr.bf16.mxu0 0
    %930 = vmatpush1.bf16.msra.mxu0 %v913
    %931 = vmatprep.subr.bf16.mxu0 0
    %932 = vmatpush1.bf16.msra.mxu0 %v914
    %933 = vmatprep.subr.bf16.mxu0 0
    %934 = vmatpush1.bf16.msra.mxu0 %v915
    %935 = vmatprep.subr.bf16.mxu0 0
    %936 = vmatpush1.bf16.msra.mxu0 %v916
    %937 = vmatprep.subr.bf16.mxu0 0
    %938 = vmatpush1.bf16.msra.mxu0 %v917
    %939 = vmatprep.subr.bf16.mxu0 0
    %940 = vmatpush1.bf16.msra.mxu0 %v918
    %941 = vmatprep.subr.bf16.mxu0 0
    %942 = vmatpush1.bf16.msra.mxu0 %v919
    %943 = vmatprep.subr.bf16.mxu0 0
    %944 = vmatpush1.bf16.msra.mxu0 %v920
    %945 = vmatprep.subr.bf16.mxu0 0
    %946 = vmatpush1.bf16.msra.mxu0 0
    %947 = vmatprep.subr.bf16.mxu0 0
    %948 = vmatpush1.bf16.msra.mxu0 0
    %949 = vmatprep.subr.bf16.mxu0 0
    %950 = vmatpush1.bf16.msra.mxu0 0
    %951 = vmatprep.subr.bf16.mxu0 0
    %952 = vmatpush1.bf16.msra.mxu0 0
    %953 = vmatprep.subr.bf16.mxu0 0
    %954 = vmatpush1.bf16.msra.mxu0 0
    %955 = vmatprep.subr.bf16.mxu0 0
    %956 = vmatpush1.bf16.msra.mxu0 0
    %957 = vmatprep.subr.bf16.mxu0 0
    %958 = vmatpush1.bf16.msra.mxu0 0
    %959 = vmatprep.subr.bf16.mxu0 0
    %960 = vmatpush1.bf16.msra.mxu0 0
    %961 = vmatprep.mubr.bf16.mxu0 0
    %962 = vmatmul.mubr.bf16.gmra.mrb[0].mxu0 %v850
    %v963 = vpop.f32.mrb[0].mxu0
    %v964 = vadd.f32 %v879, %v963
    %v965 = vpop.f32.mrb[0].mxu0
    %v966 = vpop.f32.mrb[0].mxu0
    %v967 = vadd.f32 %v879, %v966
    %v968 = vpop.f32.mrb[0].mxu0
    %969 = vmatprep.mubr.bf16.mxu0 0
    %970 = vmatmul.mubr.bf16.gmra.mrb[0].mxu0 %v851
    %v971 = vpop.f32.mrb[0].mxu0
    %v972 = vadd.f32 %v879, %v971
    %v973 = vpop.f32.mrb[0].mxu0
    %v974 = vpop.f32.mrb[0].mxu0
    %v975 = vadd.f32 %v879, %v974
    %v976 = vpop.f32.mrb[0].mxu0
    %977 = vmatprep.mubr.bf16.mxu0 0
    %978 = vmatmul.mubr.bf16.gmra.mrb[0].mxu0 %v852
    %v979 = vpop.f32.mrb[0].mxu0
    %v980 = vadd.f32 %v879, %v979
    %v981 = vpop.f32.mrb[0].mxu0
    %v982 = vpop.f32.mrb[0].mxu0
    %v983 = vadd.f32 %v879, %v982
    %v984 = vpop.f32.mrb[0].mxu0
    %985 = vmatprep.mubr.bf16.mxu0 0
    %986 = vmatmul.mubr.bf16.gmra.mrb[0].mxu0 %v853
    %v987 = vpop.f32.mrb[0].mxu0
    %v988 = vadd.f32 %v879, %v987
    %v989 = vpop.f32.mrb[0].mxu0
    %v990 = vpop.f32.mrb[0].mxu0
    %v991 = vadd.f32 %v879, %v990
    %v992 = vpop.f32.mrb[0].mxu0
    %993 = vmatprep.mubr.bf16.mxu0 0
    %994 = vmatmul.mubr.bf16.gmra.mrb[0].mxu0 %v854
    %v995 = vpop.f32.mrb[0].mxu0
    %v996 = vadd.f32 %v879, %v995
    %v997 = vpop.f32.mrb[0].mxu0
    %v998 = vpop.f32.mrb[0].mxu0
    %v999 = vadd.f32 %v879, %v998
    %v1000 = vpop.f32.mrb[0].mxu0
    %1001 = vmatprep.mubr.bf16.mxu0 0
    %1002 = vmatmul.mubr.bf16.gmra.mrb[0].mxu0 %v855
    %v1003 = vpop.f32.mrb[0].mxu0
    %v1004 = vadd.f32 %v879, %v1003
    %v1005 = vpop.f32.mrb[0].mxu0
    %v1006 = vpop.f32.mrb[0].mxu0
    %v1007 = vadd.f32 %v879, %v1006
    %v1008 = vpop.f32.mrb[0].mxu0
    %1009 = vmatprep.mubr.bf16.mxu0 0
    %1010 = vmatmul.mubr.bf16.gmra.mrb[0].mxu0 %v856
    %v1011 = vpop.f32.mrb[0].mxu0
    %v1012 = vadd.f32 %v879, %v1011
    %v1013 = vpop.f32.mrb[0].mxu0
    %v1014 = vpop.f32.mrb[0].mxu0
    %v1015 = vadd.f32 %v879, %v1014
    %v1016 = vpop.f32.mrb[0].mxu0
    %1017 = vmatprep.mubr.bf16.mxu0 0
    %1018 = vmatmul.mubr.bf16.gmra.mrb[0].mxu0 %v857
    %v1019 = vpop.f32.mrb[0].mxu0
    %v1020 = vadd.f32 %v879, %v1019
    %v1021 = vpop.f32.mrb[0].mxu0
    %v1022 = vpop.f32.mrb[0].mxu0
    %v1023 = vadd.f32 %v879, %v1022
    %v1024 = vpop.f32.mrb[0].mxu0
    %1025 = vdwg.mxu0
    %1026 = vxpose.xlu0.b32.start [1/16] %v964, 128
    %1027 = vxpose.xlu0.b32.cont [2/16] %v967, 128
    %1028 = vxpose.xlu0.b32.cont [3/16] %v972, 128
    %1029 = vxpose.xlu0.b32.cont [4/16] %v975, 128
    %1030 = vxpose.xlu0.b32.cont [5/16] %v980, 128
    %1031 = vxpose.xlu0.b32.cont [6/16] %v983, 128
    %1032 = vxpose.xlu0.b32.cont [7/16] %v988, 128
    %1033 = vxpose.xlu0.b32.cont [8/16] %v991, 128
    %1034 = vxpose.xlu0.b32.cont [9/16] %v996, 128
    %1035 = vxpose.xlu0.b32.cont [10/16] %v999, 128
    %1036 = vxpose.xlu0.b32.cont [11/16] %v1004, 128
    %1037 = vxpose.xlu0.b32.cont [12/16] %v1007, 128
    %1038 = vxpose.xlu0.b32.cont [13/16] %v1012, 128
    %1039 = vxpose.xlu0.b32.cont [14/16] %v1015, 128
    %1040 = vxpose.xlu0.b32.cont [15/16] %v1020, 128
    %1041 = vxpose.xlu0.b32.end [16/16] %v1023, 128
    %v1042 = vpop.trf.xlu0
    %v1043 = vpop.trf.xlu0
    %v1044 = vpop.trf.xlu0
    %v1045 = vpop.trf.xlu0
    %v1046 = vpop.trf.xlu0
    %v1047 = vpop.trf.xlu0
    %v1048 = vpop.trf.xlu0
    %v1049 = vpop.trf.xlu0
    %v1050 = vpop.trf.xlu0
    %v1051 = vpop.trf.xlu0
    %v1052 = vpop.trf.xlu0
    %v1053 = vpop.trf.xlu0
    %v1054 = vpop.trf.xlu0
    %v1055 = vpop.trf.xlu0
    %v1056 = vpop.trf.xlu0
    %v1057 = vpop.trf.xlu0
    %1058 = vst [vmem:[%s7] sm:$0x1] %v1042
    // Predicated region
    $region34: #{forward.1} parent=1 // pred_check
      _
    $region35: #{forward.1} parent=1 // pred_check_branch
      %1060 = sbr.rel (0) target = $region37
    $region36: #{forward.1} parent=1 // pred_region
      _
    $region37: #{forward.1} parent=1 // pred_fallthru
      _
    // Predicated region
    $region38: #{forward.1} parent=1 // pred_check
      _
    $region39: #{forward.1} parent=1 // pred_check_branch
      %1062 = sbr.rel (0) target = $region41
    $region40: #{forward.1} parent=1 // pred_region
      _
    $region41: #{forward.1} parent=1 // pred_fallthru
      _
    %1063 = vsyncpa [#allocation3], 1

</llo_original>
